<compile_context>
chip_gen: v7x
topology: tpu7x:2x2x1
jax: 0.10.0
libtpu: 0.0.40
codegen_flags: <defaults>
</compile_context>

<pallas_src>
import jax
import jax.numpy as jnp
from jax.experimental import pallas as pl
from jax.experimental.pallas import tpu as pltpu


def _round_up(x, m):
    return ((x + m - 1) // m) * m


def _edge_to_node_kernel(ts_ref, tc_ref, row_ref, edgeT_ref, w_ref, out_ref,
                         acc_ref):
    """One (node-tile, edge-step) grid point.

    ts_ref  : (n_tiles,) int32 SMEM  first edge-tile index per node tile (prefetched)
    tc_ref  : (n_tiles,) int32 SMEM  number of edge tiles per node tile  (prefetched)
    row_ref : (t_e, 1)   int32       source node id per edge (sentinel >= n_pad on padding)
    edgeT_ref: (Ce_pad, t_e) float   transposed edge-feature tile (E on lanes)
    w_ref   : (Ce_pad, Cn_pad) float transposed Linear weight (zero padded)
    out_ref : (t_n, Cn_pad) f32      output node-feature tile (written on last E step)
    acc_ref : (Ce_pad, t_n) f32      VMEM accumulator, persists across the E grid axis
    """
    n_idx = pl.program_id(0)
    e_idx = pl.program_id(1)
    t_e = row_ref.shape[0]
    t_n = acc_ref.shape[1]

    @pl.when(e_idx == 0)
    def _():
        acc_ref[...] = jnp.zeros_like(acc_ref)

    # Only edge tiles that actually contain edges for this node tile do work.
    @pl.when(e_idx < tc_ref[n_idx])
    def _():
        # Subtract the tile offset on the small (t_e, 1) column, not the big tile.
        row_local = row_ref[...] - n_idx * t_n                      # (t_e, 1) int32
        lane_ids = jax.lax.broadcasted_iota(jnp.int32, (t_e, t_n), 1)
        # Transposed one-hot: onehotT[e, n] = 1 iff edge e targets local node n.
        onehotT = (row_local == lane_ids).astype(edgeT_ref.dtype)   # (t_e, t_n)
        # Accumulate (edgesT @ onehotT) over the edge tiles of this node tile.
        acc_ref[...] += jnp.dot(edgeT_ref[...], onehotT,
                                preferred_element_type=jnp.float32)

    @pl.when(e_idx == pl.num_programs(1) - 1)
    def _():
        # out[t_n, Cn] = accT.T @ W   (contract the tiny Ce dim; lane-dense store).
        out_ref[...] = jax.lax.dot_general(
            acc_ref[...], w_ref[...],
            dimension_numbers=(((0,), (0,)), ((), ())),
            preferred_element_type=jnp.float32,
            precision=jax.lax.Precision.HIGHEST,
        ).astype(out_ref.dtype)


def edge_to_node_aggregation(edge_features, row, weight_t, num_nodes,
                             *, tile_n=256, tile_e=2048):
    """out[n] = sum_{e: row[e]==n} edge_features[e] @ weight_t   (f32).

    edge_features: [E, Ce] float
    row          : [E]     int   (values in [0, num_nodes))
    weight_t     : [Ce, Cn] float (transpose of the torch Linear weight)
    """
    E, Ce = edge_features.shape
    Ce_w, Cn = weight_t.shape
    assert Ce_w == Ce

    # ---- tile selection ------------------------------------------------------
    tile_n = _round_up(max(tile_n, 8), 8)
    tile_e = _round_up(max(tile_e, 128), 128)
    n_pad8 = _round_up(num_nodes, 8)
    if n_pad8 > 8:
        # Ensure >= 2 node tiles whenever possible so megacore (v7x) gets work.
        t_n = min(tile_n, _round_up((n_pad8 + 1) // 2, 8))
    else:
        t_n = 8
    t_e = min(tile_e, _round_up(E, 128))

    n_pad = _round_up(n_pad8, t_n)
    e_pad = _round_up(E, t_e)
    ce_pad = _round_up(Ce, 8)
    cn_pad = _round_up(Cn, 128)              # lane-dense unmasked output stores
    n_tiles = n_pad // t_n
    e_tiles = e_pad // t_e

    # ---- wrapper preprocessing: sort edges by destination node --------------
    row = row.astype(jnp.int32)
    order = jnp.argsort(row)
    row_s = row[order]
    edges_s = edge_features[order]

    # Transposed, padded edges: (Ce_pad, E_pad) with E on the lane axis.
    edgeT_p = jnp.zeros((ce_pad, e_pad), edge_features.dtype
                        ).at[:Ce, :E].set(edges_s.T)
    w_p = jnp.zeros((ce_pad, cn_pad), weight_t.dtype).at[:Ce, :Cn].set(weight_t)
    # Row ids as a column; padded edges get sentinel n_pad (never matches any node).
    row_col = jnp.full((e_pad, 1), n_pad, dtype=jnp.int32).at[:E, 0].set(row_s)

    # Per-node-tile contiguous edge ranges (edges are sorted by row).
    bounds = jnp.arange(n_tiles + 1, dtype=jnp.int32) * t_n
    starts = jnp.searchsorted(row_s, bounds[:-1], side='left').astype(jnp.int32)
    ends = jnp.searchsorted(row_s, bounds[1:], side='left').astype(jnp.int32)
    start_tile_raw = starts // t_e
    tile_count = jnp.where(ends > starts,
                           (ends - 1) // t_e - start_tile_raw + 1,
                           0).astype(jnp.int32)
    tile_start = jnp.minimum(start_tile_raw, e_tiles - 1).astype(jnp.int32)

    # Data-dependent edge-block index: advance while there is real work, then
    # clamp (same block index => the pipeline skips the DMA).
    def _edge_blk(i, j, ts, tc):
        return ts[i] + jnp.minimum(j, jnp.maximum(tc[i] - 1, 0))

    grid = (n_tiles, e_tiles)

    # Advisory cost (post-reassociation, edges streamed ~once thanks to skipping).
    itemsize = jnp.dtype(edge_features.dtype).itemsize
    cost = pl.CostEstimate(
        flops=2 * e_pad * ce_pad * t_n + 2 * n_pad * ce_pad * cn_pad,
        transcendentals=0,
        bytes_accessed=(edgeT_p.size * itemsize + e_pad * 4
                        + w_p.size * itemsize + n_pad * cn_pad * 4),
    )

    # VMEM budget: double-buffered inputs/outputs + accumulator + one-hot temps.
    def _vmem(rows, cols, bpe=4):
        return _round_up(rows, 8) * _round_up(cols, 128) * bpe
    vmem_est = (2 * _vmem(ce_pad, t_e, itemsize)     # edgeT tiles (double-buffer)
                + 2 * _vmem(t_e, 1)                  # row column tiles (lane-padded)
                + 2 * _vmem(ce_pad, cn_pad, itemsize)  # weight
                + 2 * _vmem(t_n, cn_pad)             # output tiles
                + _vmem(ce_pad, t_n)                 # accumulator scratch
                + 3 * _vmem(t_e, t_n))               # one-hot / iota temporaries
    # Cap at 40 MiB: v7x only has 64 MiB VMEM per TensorCore.
    vmem_limit = int(min(max(2 * vmem_est, 16 * 1024 * 1024), 40 * 1024 * 1024))

    out_p = pl.pallas_call(
        _edge_to_node_kernel,
        out_shape=jax.ShapeDtypeStruct((n_pad, cn_pad), jnp.float32),
        grid_spec=pltpu.PrefetchScalarGridSpec(
            num_scalar_prefetch=2,
            grid=grid,
            in_specs=[
                pl.BlockSpec((t_e, 1),
                             lambda i, j, ts, tc: (_edge_blk(i, j, ts, tc), 0)),
                pl.BlockSpec((ce_pad, t_e),
                             lambda i, j, ts, tc: (0, _edge_blk(i, j, ts, tc))),
                pl.BlockSpec((ce_pad, cn_pad),
                             lambda i, j, ts, tc: (0, 0)),
            ],
            out_specs=pl.BlockSpec((t_n, cn_pad),
                                   lambda i, j, ts, tc: (i, 0)),
            scratch_shapes=[pltpu.VMEM((ce_pad, t_n), jnp.float32)],
        ),
        compiler_params=pltpu.CompilerParams(
            dimension_semantics=("parallel", "arbitrary"),
            vmem_limit_bytes=vmem_limit,
        ),
        cost_estimate=cost,
    )(tile_start, tile_count, row_col, edgeT_p, w_p)

    # Strip node / channel padding.
    return out_p[:num_nodes, :Cn]


def _reference(edge_features, row, weight_t, num_nodes):
    h = edge_features @ weight_t
    return jnp.zeros((num_nodes, weight_t.shape[1]), jnp.float32).at[row].add(h)


if __name__ == "__main__":
    key = jax.random.PRNGKey(0)

    # ---- case 1: sizes consistent with the module's forward -----------------
    # num_nodes=16, E=64 edges, edge_in_channels=8, in_channels=32
    num_nodes = 16
    num_edges = 64
    edge_in_channels = 8
    in_channels = 32

    k_ef, k_w, k_row, k2 = jax.random.split(key, 4)
    edge_features = jax.random.normal(
        k_ef, (num_edges, edge_in_channels), dtype=jnp.float32)

    # torch.nn.Linear-style init: weight [in_channels, edge_in_channels],
    # uniform in [-1/sqrt(fan_in), 1/sqrt(fan_in)]; kernel uses its transpose.
    bound = 1.0 / jnp.sqrt(jnp.float32(edge_in_channels))
    weight = jax.random.uniform(
        k_w, (in_channels, edge_in_channels), dtype=jnp.float32,
        minval=-bound, maxval=bound)
    weight_t = weight.T                                   # [Ce, Cn]

    row = jax.random.randint(k_row, (num_edges,), 0, num_nodes, dtype=jnp.int32)

    out = edge_to_node_aggregation(edge_features, row, weight_t, num_nodes)
    out = jax.block_until_ready(out)
    ref = _reference(edge_features, row, weight_t, num_nodes)
    assert out.shape == (num_nodes, in_channels)
    assert jnp.allclose(out, ref, atol=1e-4, rtol=1e-4), "case1 mismatch"

    # ---- case 2: multi-tile grid (3 node tiles, 3 edge tiles, skipping path) --
    n2, e2 = 40, 300
    k_ef2, k_row2 = jax.random.split(k2)
    ef2 = jax.random.normal(k_ef2, (e2, edge_in_channels), dtype=jnp.float32)
    row2 = jax.random.randint(k_row2, (e2,), 0, n2, dtype=jnp.int32)
    out2 = edge_to_node_aggregation(ef2, row2, weight_t, n2,
                                    tile_n=16, tile_e=128)
    out2 = jax.block_until_ready(out2)
    ref2 = _reference(ef2, row2, weight_t, n2)
    assert out2.shape == (n2, in_channels)
    assert jnp.allclose(out2, ref2, atol=1e-4, rtol=1e-4), "case2 mismatch"

    print("KERNEL_OK")
</pallas_src>

<mosaic_0001>
module attributes {stable_mosaic.version = 11 : i64} {
  func.func @_edge_to_node_kernel(%arg0: i32, %arg1: i32, %arg2: memref<2xi32, #tpu.memory_space<smem>>, %arg3: memref<2xi32, #tpu.memory_space<smem>>, %arg4: memref<128x1xi32, #tpu.memory_space<vmem>>, %arg5: memref<8x128xf32, #tpu.memory_space<vmem>>, %arg6: memref<8x128xf32, #tpu.memory_space<vmem>>, %arg7: memref<8x128xf32, #tpu.memory_space<vmem>>, %arg8: memref<8x8xf32, #tpu.memory_space<vmem>>) attributes {dimension_semantics = [#tpu.dimension_semantics<parallel>, #tpu.dimension_semantics<arbitrary>], iteration_bounds = array<i64: 2, 1>, scalar_prefetch = 2 : i64, scratch_operands = 1 : i64, tpu.core_type = #tpu.core_type<tc>, window_params = [{transform_indices = @transform_0, window_bounds = array<i64: 128, 1>}, {transform_indices = @transform_1, window_bounds = array<i64: 8, 128>}, {pipeline_mode = #tpu.pipeline_mode<synchronous>, transform_indices = @transform_2, window_bounds = array<i64: 8, 128>}, {transform_indices = @transform_3, window_bounds = array<i64: 8, 128>}]} {
    %c0_i32 = arith.constant 0 : i32
    %0 = arith.cmpi eq, %arg1, %c0_i32 : i32
    %1 = arith.extui %0 : i1 to i32
    %c0_i32_0 = arith.constant 0 : i32
    %2 = arith.cmpi ne, %1, %c0_i32_0 : i32
    scf.if %2 {
      %cst = arith.constant 0.000000e+00 : f32
      %11 = vector.broadcast %cst : f32 to vector<8x8xf32>
      %c0 = arith.constant 0 : index
      %c0_4 = arith.constant 0 : index
      %12 = vector.load %arg8[%c0, %c0_4] : memref<8x8xf32, #tpu.memory_space<vmem>>, vector<8x8xf32>
      tpu.vector_store %arg8[%c0, %c0_4], %11 {strides = array<i32>} : memref<8x8xf32, #tpu.memory_space<vmem>>, vector<8x8xf32>,
    } else {
    }
    %3 = arith.index_cast %arg0 : i32 to index
    %4 = memref.load %arg3[%3] : memref<2xi32, #tpu.memory_space<smem>>
    %5 = arith.cmpi slt, %arg1, %4 : i32
    %6 = arith.extui %5 : i1 to i32
    %c0_i32_1 = arith.constant 0 : i32
    %7 = arith.cmpi ne, %6, %c0_i32_1 : i32
    scf.if %7 {
      %c0 = arith.constant 0 : index
      %c0_4 = arith.constant 0 : index
      %11 = vector.load %arg4[%c0, %c0_4] : memref<128x1xi32, #tpu.memory_space<vmem>>, vector<128x1xi32>
      %c8_i32 = arith.constant 8 : i32
      %12 = arith.muli %arg0, %c8_i32 : i32
      %13 = vector.broadcast %12 : i32 to vector<128x1xi32>
      %14 = arith.subi %11, %13 : vector<128x1xi32>
      %15 = tpu.iota {dimensions = array<i32: 1>} : vector<128x8xi32>
      %16 = vector.broadcast %14 : vector<128x1xi32> to vector<128x8xi32>
      %17 = arith.cmpi eq, %16, %15 : vector<128x8xi32>
      %18 = arith.extui %17 : vector<128x8xi1> to vector<128x8xi32>
      %19 = arith.sitofp %18 : vector<128x8xi32> to vector<128x8xf32>
      %c0_5 = arith.constant 0 : index
      %c0_6 = arith.constant 0 : index
      %20 = vector.load %arg8[%c0_5, %c0_6] : memref<8x8xf32, #tpu.memory_space<vmem>>, vector<8x8xf32>
      %c0_7 = arith.constant 0 : index
      %c0_8 = arith.constant 0 : index
      %21 = vector.load %arg5[%c0_7, %c0_8] : memref<8x128xf32, #tpu.memory_space<vmem>>, vector<8x128xf32>
      %cst = arith.constant dense<0.000000e+00> : vector<8x8xf32>
      %22 = tpu.matmul %21, %19, %cst {dimension_numbers = #tpu.dot_dimension_numbers<[1], [0], [0], [1], [0, 0, 1, 1], [], []>} : vector<8x128xf32>, vector<128x8xf32>, vector<8x8xf32> -> vector<8x8xf32>
      %23 = arith.addf %20, %22 : vector<8x8xf32>
      %c0_9 = arith.constant 0 : index
      %c0_10 = arith.constant 0 : index
      %24 = vector.load %arg8[%c0_9, %c0_10] : memref<8x8xf32, #tpu.memory_space<vmem>>, vector<8x8xf32>
      tpu.vector_store %arg8[%c0_9, %c0_10], %23 {strides = array<i32>} : memref<8x8xf32, #tpu.memory_space<vmem>>, vector<8x8xf32>,
    } else {
    }
    %c0_i32_2 = arith.constant 0 : i32
    %8 = arith.cmpi eq, %arg1, %c0_i32_2 : i32
    %9 = arith.extui %8 : i1 to i32
    %c0_i32_3 = arith.constant 0 : i32
    %10 = arith.cmpi ne, %9, %c0_i32_3 : i32
    scf.if %10 {
      %c0 = arith.constant 0 : index
      %c0_4 = arith.constant 0 : index
      %11 = vector.load %arg8[%c0, %c0_4] : memref<8x8xf32, #tpu.memory_space<vmem>>, vector<8x8xf32>
      %c0_5 = arith.constant 0 : index
      %c0_6 = arith.constant 0 : index
      %12 = vector.load %arg6[%c0_5, %c0_6] : memref<8x128xf32, #tpu.memory_space<vmem>>, vector<8x128xf32>
      %cst = arith.constant dense<0.000000e+00> : vector<8x128xf32>
      %13 = tpu.matmul %11, %12, %cst {dimension_numbers = #tpu.dot_dimension_numbers<[0], [0], [1], [1], [0, 1, 1, 1], [], []>, precision = #tpu.contract_precision<fp32>} : vector<8x8xf32>, vector<8x128xf32>, vector<8x128xf32> -> vector<8x128xf32>
      %c0_7 = arith.constant 0 : index
      %c0_8 = arith.constant 0 : index
      %14 = vector.load %arg7[%c0_7, %c0_8] : memref<8x128xf32, #tpu.memory_space<vmem>>, vector<8x128xf32>
      tpu.vector_store %arg7[%c0_7, %c0_8], %13 {strides = array<i32>} : memref<8x128xf32, #tpu.memory_space<vmem>>, vector<8x128xf32>,
    } else {
    }
    return
  }
  func.func @transform_0(%arg0: i32, %arg1: i32, %arg2: memref<2xi32, #tpu.memory_space<smem>>, %arg3: memref<2xi32, #tpu.memory_space<smem>>) -> (i32, i32) {
    %0 = arith.index_cast %arg0 : i32 to index
    %1 = memref.load %arg2[%0] : memref<2xi32, #tpu.memory_space<smem>>
    %2 = arith.index_cast %arg0 : i32 to index
    %3 = memref.load %arg3[%2] : memref<2xi32, #tpu.memory_space<smem>>
    %c1_i32 = arith.constant 1 : i32
    %4 = arith.subi %3, %c1_i32 : i32
    %c0_i32 = arith.constant 0 : i32
    %5 = arith.maxsi %4, %c0_i32 : i32
    %6 = arith.minsi %arg1, %5 : i32
    %7 = arith.addi %1, %6 : i32
    %c0_i32_0 = arith.constant 0 : i32
    %c0_i32_1 = arith.constant 0 : i32
    return %7, %c0_i32_0 : i32, i32
  }
  func.func @transform_1(%arg0: i32, %arg1: i32, %arg2: memref<2xi32, #tpu.memory_space<smem>>, %arg3: memref<2xi32, #tpu.memory_space<smem>>) -> (i32, i32) {
    %0 = arith.index_cast %arg0 : i32 to index
    %1 = memref.load %arg2[%0] : memref<2xi32, #tpu.memory_space<smem>>
    %2 = arith.index_cast %arg0 : i32 to index
    %3 = memref.load %arg3[%2] : memref<2xi32, #tpu.memory_space<smem>>
    %c1_i32 = arith.constant 1 : i32
    %4 = arith.subi %3, %c1_i32 : i32
    %c0_i32 = arith.constant 0 : i32
    %5 = arith.maxsi %4, %c0_i32 : i32
    %6 = arith.minsi %arg1, %5 : i32
    %7 = arith.addi %1, %6 : i32
    %c0_i32_0 = arith.constant 0 : i32
    %c0_i32_1 = arith.constant 0 : i32
    return %c0_i32_0, %7 : i32, i32
  }
  func.func @transform_2(%arg0: i32, %arg1: i32, %arg2: memref<2xi32, #tpu.memory_space<smem>>, %arg3: memref<2xi32, #tpu.memory_space<smem>>) -> (i32, i32) {
    %c0_i32 = arith.constant 0 : i32
    %c0_i32_0 = arith.constant 0 : i32
    %c0_i32_1 = arith.constant 0 : i32
    return %c0_i32, %c0_i32_0 : i32, i32
  }
  func.func @transform_3(%arg0: i32, %arg1: i32, %arg2: memref<2xi32, #tpu.memory_space<smem>>, %arg3: memref<2xi32, #tpu.memory_space<smem>>) -> (i32, i32) {
    %c0_i32 = arith.constant 0 : i32
    %c0_i32_0 = arith.constant 0 : i32
    return %arg0, %c0_i32 : i32, i32
  }
}

</mosaic_0001>

<llo_original>
// kernel: tpu_custom_call.1
$region0: #{tpu_custom_call.1}
  #allocation0 [shape = 'u32[]', space=smem, size = 0x4, offset = 0x4, fixed_abs, tag = 'smem constant byte address 0x4 - core index']
  #allocation1 [shape = 'u32[144,128]{1,0:T(1,128)}', space=vmem, size = 0x12000, scoped, tag = 'internal scratch']
  #allocation2 [shape = 'f32[8,8]{1,0:T(8,128)}', space=vmem, size = 0x1000, scoped, tag = 'scratch operand']
  #allocation3 [shape = 's32[1]{0}', space=sflag, size = 0x4, scoped, tag = 'scoped memory for tpu_custom_call.1']
  #allocation4 [shape = 'u8[512]{0}', space=smem, size = 0x200, scoped, tag = 'prefetched SMEM operand 0']
  #allocation5 [shape = 'u8[512]{0}', space=smem, size = 0x200, scoped, tag = 'prefetched SMEM operand 1']
  %s0 = inlined_call_operand.vmem [shape: s32[2], index: 0, kind: input, shape index: {}]
  %s1 = inlined_call_operand.vmem [shape: s32[2], index: 1, kind: input, shape index: {}]
  %s2 = inlined_call_operand.vmem [shape: s32[128,1], index: 2, kind: input, shape index: {}]
  %s3 = inlined_call_operand.vmem [shape: f32[8,128], index: 3, kind: input, shape index: {}]
  %s4 = inlined_call_operand.vmem [shape: f32[8,128], index: 4, kind: input, shape index: {}]
  %s5 = inlined_call_operand.hbm [shape: f32[16,128], index: 5, kind: output, shape index: {}]
  %s6 = sld [smem:[#allocation0]]
  $region57: #{tpu_custom_call.1} parent=0
    _
  %s8 = ssub.s32 1, %s6
  %s9 = scalar_select 0, %s8, %s6
  %s10 = sshll.u32 %s0, 4
  %s11 = int_to_ptr.vmem [resolvable:$true] %s10
  %13 = dma.vmem_to_smem %s11, 16, [#allocation4], [#allocation3]
  %s14 = sshll.u32 %s1, 4
  %s15 = int_to_ptr.vmem [resolvable:$true] %s14
  %17 = dma.vmem_to_smem %s15, 16, [#allocation5], [#allocation3]
  %18 = dma.done [#allocation3], 32
  %19 = sfence
  $region1: #{tpu_custom_call.1} parent=0
    #allocation6 [shape = 'u8[8192]{0}', space=vmem, size = 0x2000, scoped, tag = 'output window, operand 0']
    #allocation7 [shape = 's32[2]{0}', space=sflag, size = 0x8, scoped, tag = 'scoped memory for tpu_custom_call.1']
    %20 = vsyncpa [#allocation7], 0
    %s21 = scalar_lea.sflag [#allocation7], 1
    %22 = vsyncpa %s21, 0
    loop: start=0, step=1, limit=4
    $region2: #{tpu_custom_call.1} parent=1 // loop_pre_header
      _
    $region3: #{tpu_custom_call.1} parent=1 // loop_header
      %s24 = sphi 0, %s28
      %p25 = scmp.ge.s32.totalorder %s24, 4
      %s31 = sphi 0, %s43
      %s32 = sphi 0, %s39
      %s33 = sphi 0, %s31
      %s34 = sphi 0, %s32
      %s35 = sphi 0, %s33
      %s36 = sphi 0, %s34
      %s62 = sphi 0, %s64
      %s65 = sphi 0, %s62
      %s66 = sphi 0, %s65
      %s82 = sphi 0, %s66
      %s104 = sphi 0, %s106
      %s107 = sphi 0, %s104
      %s108 = sphi 0, %s107
      %s124 = sphi 0, %s108
      %s128 = sphi 0, %s128
      %s130 = sphi 0, %s128
      %s131 = sphi 0, %s130
      %s145 = sphi 0, %s131
      %s151 = sphi 0, %s153
      %s154 = sphi 0, %s151
      %s155 = sphi 0, %s154
      %s171 = sphi 0, %s155
    $region4: #{tpu_custom_call.1} parent=1 // loop_header_branch
      %27 = sbr.rel (%p25) target = $region8
    $region5: #{tpu_custom_call.1} parent=1 // loop_body
      %s29 = ssub.s32 %s24, 1
      %s30 = ssub.s32 %s24, 2
      %s37 = sadd.s32 1, %s32
      %p38 = scmp.ge.s32.totalorder %s37, 1
      %s39 = scalar_select %p38, 0, %s37
      %s40 = sadd.s32 1, %s31
      %s41 = scalar_select %p38, %s40, %s31
      %p42 = scmp.ge.s32.totalorder %s41, 2
      %s43 = scalar_select %p42, 0, %s41
      %s44 = sld [smem:[#allocation4 + %s31]]
      %s45 = sld [smem:[#allocation5 + %s31]]
      %s46 = ssub.s32 %s45, 1
      %p47 = scmp.gt.s32.totalorder %s46, 0
      %s48 = scalar_select %p47, %s46, 0
      %p49 = scmp.lt.s32.totalorder %s32, %s48
      %s50 = scalar_select %p49, %s32, %s48
      %s51 = sadd.s32 %s44, %s50
      %s52 = sld [smem:[#allocation4 + %s43]]
      %s53 = sld [smem:[#allocation5 + %s43]]
      %s54 = ssub.s32 %s53, 1
      %p55 = scmp.gt.s32.totalorder %s54, 0
      %s56 = scalar_select %p55, %s54, 0
      %p57 = scmp.lt.s32.totalorder %s39, %s56
      %s58 = scalar_select %p57, %s39, %s56
      %s59 = sadd.s32 %s52, %s58
      %s60 = ssub.s32 %s51, %s59
      %p61 = scmp.eq.s32.totalorder %s60, 0
      %s63 = sadd.s32 %s62, 1
      %s64 = scalar_select %p61, %s62, %s63
      %p67 = pneg %p61
      %p68 = scmp.eq.s32.totalorder %s24, 1
      %p69 = por %p67, %p68
      %p70 = scmp.ne.s32.totalorder %s62, %s65
      %p71 = scmp.eq.s32.totalorder %s24, 0
      %p72 = por %p70, %p71
      %p73 = scmp.ne.s32.totalorder %s62, %s65
      %p74 = scmp.eq.s32.totalorder %s29, 1
      %p75 = por %p73, %p74
      %p76 = scmp.ne.s32.totalorder %s65, %s66
      %p77 = scmp.eq.s32.totalorder %s29, 0
      %p78 = por %p76, %p77
      %p79 = scmp.ne.s32.totalorder %s65, %s66
      %p80 = scmp.eq.s32.totalorder %s30, 1
      %p81 = por %p79, %p80
      %p83 = scmp.ne.s32.totalorder %s66, %s82
      %p84 = scmp.eq.s32.totalorder %s30, 0
      %p85 = por %p83, %p84
      %s86 = sld [smem:[#allocation4 + %s31]]
      %s87 = sld [smem:[#allocation5 + %s31]]
      %s88 = ssub.s32 %s87, 1
      %p89 = scmp.gt.s32.totalorder %s88, 0
      %s90 = scalar_select %p89, %s88, 0
      %p91 = scmp.lt.s32.totalorder %s32, %s90
      %s92 = scalar_select %p91, %s32, %s90
      %s93 = sadd.s32 %s86, %s92
      %s94 = sld [smem:[#allocation4 + %s43]]
      %s95 = sld [smem:[#allocation5 + %s43]]
      %s96 = ssub.s32 %s95, 1
      %p97 = scmp.gt.s32.totalorder %s96, 0
      %s98 = scalar_select %p97, %s96, 0
      %p99 = scmp.lt.s32.totalorder %s39, %s98
      %s100 = scalar_select %p99, %s39, %s98
      %s101 = sadd.s32 %s94, %s100
      %s102 = ssub.s32 %s93, %s101
      %p103 = scmp.eq.s32.totalorder %s102, 0
      %s105 = sadd.s32 %s104, 1
      %s106 = scalar_select %p103, %s104, %s105
      %p109 = pneg %p103
      %p110 = scmp.eq.s32.totalorder %s24, 1
      %p111 = por %p109, %p110
      %p112 = scmp.ne.s32.totalorder %s104, %s107
      %p113 = scmp.eq.s32.totalorder %s24, 0
      %p114 = por %p112, %p113
      %p115 = scmp.ne.s32.totalorder %s104, %s107
      %p116 = scmp.eq.s32.totalorder %s29, 1
      %p117 = por %p115, %p116
      %p118 = scmp.ne.s32.totalorder %s107, %s108
      %p119 = scmp.eq.s32.totalorder %s29, 0
      %p120 = por %p118, %p119
      %p121 = scmp.ne.s32.totalorder %s107, %s108
      %p122 = scmp.eq.s32.totalorder %s30, 1
      %p123 = por %p121, %p122
      %p125 = scmp.ne.s32.totalorder %s108, %s124
      %p126 = scmp.eq.s32.totalorder %s30, 0
      %p127 = por %p125, %p126
      %s129 = sadd.s32 %s128, 1
      %p132 = scmp.eq.s32.totalorder %s24, 1
      %p133 = scmp.ne.s32.totalorder %s128, %s130
      %p134 = scmp.eq.s32.totalorder %s24, 0
      %p135 = por %p133, %p134
      %p136 = scmp.ne.s32.totalorder %s128, %s130
      %p137 = scmp.eq.s32.totalorder %s29, 1
      %p138 = por %p136, %p137
      %p139 = scmp.ne.s32.totalorder %s130, %s131
      %p140 = scmp.eq.s32.totalorder %s29, 0
      %p141 = por %p139, %p140
      %p142 = scmp.ne.s32.totalorder %s130, %s131
      %p143 = scmp.eq.s32.totalorder %s30, 1
      %p144 = por %p142, %p143
      %p146 = scmp.ne.s32.totalorder %s131, %s145
      %p147 = scmp.eq.s32.totalorder %s30, 0
      %p148 = por %p146, %p147
      %s149 = ssub.s32 %s31, %s43
      %p150 = scmp.eq.s32.totalorder %s149, 0
      %s152 = sadd.s32 %s151, 1
      %s153 = scalar_select %p150, %s151, %s152
      %p156 = pneg %p150
      %p157 = scmp.eq.s32.totalorder %s24, 1
      %p158 = por %p156, %p157
      %p159 = scmp.ne.s32.totalorder %s151, %s154
      %p160 = scmp.eq.s32.totalorder %s24, 0
      %p161 = por %p159, %p160
      %p162 = scmp.ne.s32.totalorder %s151, %s154
      %p163 = scmp.eq.s32.totalorder %s29, 1
      %p164 = por %p162, %p163
      %p165 = scmp.ne.s32.totalorder %s154, %s155
      %p166 = scmp.eq.s32.totalorder %s29, 0
      %p167 = por %p165, %p166
      %p168 = scmp.ne.s32.totalorder %s154, %s155
      %p169 = scmp.eq.s32.totalorder %s30, 1
      %p170 = por %p168, %p169
      %p172 = scmp.ne.s32.totalorder %s155, %s171
      %p173 = scmp.eq.s32.totalorder %s30, 0
      %p174 = por %p172, %p173
      %p175 = scmp.le.s32.totalorder 1, %s24
      %p176 = scmp.lt.s32.totalorder %s24, 3
      %p177 = pnand %p175, %p176
      %p178 = pneg %p177
      // Predicated region
      $region9: #{tpu_custom_call.1} parent=5 // pred_check
        _
      $region10: #{tpu_custom_call.1} parent=5 // pred_check_branch
        %180 = sbr.rel (%p177) target = $region12
      $region11: #{tpu_custom_call.1} parent=5 // pred_region
        %s181 = ssub.s32 %s24, 1
        // Predicated region
        $region13: #{tpu_custom_call.1} parent=11 // pred_check
          %p182 = pneg %p141
        $region14: #{tpu_custom_call.1} parent=11 // pred_check_branch
          %184 = sbr.rel (%p182) target = $region16
        $region15: #{tpu_custom_call.1} parent=11 // pred_region
          _
        $region16: #{tpu_custom_call.1} parent=11 // pred_fallthru
          _
      $region12: #{tpu_custom_call.1} parent=5 // pred_fallthru
        _
      %p185 = scmp.lt.s32.totalorder %s24, 2
      // Predicated region
      $region17: #{tpu_custom_call.1} parent=5 // pred_check
        %p186 = pneg %p185
      $region18: #{tpu_custom_call.1} parent=5 // pred_check_branch
        %188 = sbr.rel (%p186) target = $region20
      $region19: #{tpu_custom_call.1} parent=5 // pred_region
        // Predicated region
        $region21: #{tpu_custom_call.1} parent=19 // pred_check
          %p189 = pneg %p72
        $region22: #{tpu_custom_call.1} parent=19 // pred_check_branch
          %191 = sbr.rel (%p189) target = $region24
        $region23: #{tpu_custom_call.1} parent=19 // pred_region
          %s192 = sld [smem:[#allocation4 + %s31]]
          %s193 = sld [smem:[#allocation5 + %s31]]
          %s194 = ssub.s32 %s193, 1
          %p195 = scmp.gt.s32.totalorder %s194, 0
          %s196 = scalar_select %p195, %s194, 0
          %p197 = scmp.lt.s32.totalorder %s32, %s196
          %s198 = scalar_select %p197, %s32, %s196
          %s199 = sadd.s32 %s192, %s198
          %s200 = smul.u32 16, %s199
          %p201 = scmp.lt.s32.totalorder %s200, 15
          %s202 = scalar_select %p201, %s200, 15
          %s203 = smul.addr %s202, 8
          %s204 = scalar_lea.vmem %s2, %s203
          %s205 = sld [smem:[#allocation4 + %s31]]
          %s206 = sld [smem:[#allocation5 + %s31]]
          %s207 = ssub.s32 %s206, 1
          %p208 = scmp.gt.s32.totalorder %s207, 0
          %s209 = scalar_select %p208, %s207, 0
          %p210 = scmp.lt.s32.totalorder %s32, %s209
          %s211 = scalar_select %p210, %s32, %s209
          %s212 = sadd.s32 %s205, %s211
          %s213 = smul.u32 16, %s212
        $region24: #{tpu_custom_call.1} parent=19 // pred_fallthru
          _
        // Predicated region
        $region25: #{tpu_custom_call.1} parent=19 // pred_check
          %p214 = pneg %p114
        $region26: #{tpu_custom_call.1} parent=19 // pred_check_branch
          %216 = sbr.rel (%p214) target = $region28
        $region27: #{tpu_custom_call.1} parent=19 // pred_region
          %s217 = sld [smem:[#allocation4 + %s31]]
          %s218 = sld [smem:[#allocation5 + %s31]]
          %s219 = ssub.s32 %s218, 1
          %p220 = scmp.gt.s32.totalorder %s219, 0
          %s221 = scalar_select %p220, %s219, 0
          %p222 = scmp.lt.s32.totalorder %s32, %s221
          %s223 = scalar_select %p222, %s32, %s221
          %s224 = sadd.s32 %s217, %s223
          %p225 = scmp.lt.s32.totalorder %s224, 0
          %s226 = scalar_select %p225, %s224, 0
          %s227 = smul.addr %s226, 8
          %s228 = scalar_lea.vmem %s3, %s227
          %s229 = sld [smem:[#allocation4 + %s31]]
          %s230 = sld [smem:[#allocation5 + %s31]]
          %s231 = ssub.s32 %s230, 1
          %p232 = scmp.gt.s32.totalorder %s231, 0
          %s233 = scalar_select %p232, %s231, 0
          %p234 = scmp.lt.s32.totalorder %s32, %s233
          %s235 = scalar_select %p234, %s32, %s233
          %s236 = sadd.s32 %s229, %s235
        $region28: #{tpu_custom_call.1} parent=19 // pred_fallthru
          _
      $region20: #{tpu_custom_call.1} parent=5 // pred_fallthru
        _
      %p237 = scmp.le.s32.totalorder 1, %s24
      %p238 = scmp.lt.s32.totalorder %s24, 3
      %p239 = pnand %p237, %p238
      %p240 = pneg %p239
      // Predicated region
      $region29: #{tpu_custom_call.1} parent=5 // pred_check
        _
      $region30: #{tpu_custom_call.1} parent=5 // pred_check_branch
        %242 = sbr.rel (%p239) target = $region32
      $region31: #{tpu_custom_call.1} parent=5 // pred_region
        %s243 = ssub.s32 %s24, 1
        %s244 = sld [smem:[#allocation4 + %s33]]
        %s245 = sld [smem:[#allocation5 + %s33]]
        %s246 = ssub.s32 %s245, 1
        %p247 = scmp.gt.s32.totalorder %s246, 0
        %s248 = scalar_select %p247, %s246, 0
        %p249 = scmp.lt.s32.totalorder %s34, %s248
        %s250 = scalar_select %p249, %s34, %s248
        %s251 = sadd.s32 %s244, %s250
        %s252 = smul.u32 16, %s251
        %p253 = scmp.lt.s32.totalorder %s252, 15
        %s254 = scalar_select %p253, %s252, 15
        %s255 = smul.addr %s254, 8
        %s256 = scalar_lea.vmem %s2, %s255
        %p257 = pneg %p78
        %p258 = pneg %p75
        %s259 = sld [smem:[#allocation4 + %s33]]
        %s260 = sld [smem:[#allocation5 + %s33]]
        %s261 = ssub.s32 %s260, 1
        %p262 = scmp.gt.s32.totalorder %s261, 0
        %s263 = scalar_select %p262, %s261, 0
        %p264 = scmp.lt.s32.totalorder %s34, %s263
        %s265 = scalar_select %p264, %s34, %s263
        %s266 = sadd.s32 %s259, %s265
        %p267 = scmp.lt.s32.totalorder %s266, 0
        %s268 = scalar_select %p267, %s266, 0
        %s269 = smul.addr %s268, 8
        %s270 = scalar_lea.vmem %s3, %s269
        %p271 = pneg %p120
        %p272 = pneg %p117
        %p273 = pneg %p141
        %p274 = pneg %p138
        %p275 = pneg %p167
        %p276 = pneg %p164
        %s277 = sand.u32 %s154, 1
        %s278 = scalar_lea.sflag [#allocation7], %s277
        %s279 = sand.u32 %s154, 1
        %s280 = smul.addr %s279, 8
        %s281 = scalar_lea.vmem [#allocation6], %s280
        %s282 = sld [smem:[#allocation4 + %s33]]
        %s283 = sld [smem:[#allocation5 + %s33]]
        %s284 = ssub.s32 %s283, 1
        %p285 = scmp.gt.s32.totalorder %s284, 0
        %s286 = scalar_select %p285, %s284, 0
        %p287 = scmp.lt.s32.totalorder %s34, %s286
        %s288 = scalar_select %p287, %s34, %s286
        %s289 = sadd.s32 %s282, %s288
        %s290 = smul.u32 16, %s289
        %p291 = scmp.lt.s32.totalorder %s290, 15
        %s292 = scalar_select %p291, %s290, 15
        %s293 = smul.addr %s292, 8
        %s294 = scalar_lea.vmem %s2, %s293
        %s295 = sld [smem:[#allocation4 + %s33]]
        %s296 = sld [smem:[#allocation5 + %s33]]
        %s297 = ssub.s32 %s296, 1
        %p298 = scmp.gt.s32.totalorder %s297, 0
        %s299 = scalar_select %p298, %s297, 0
        %p300 = scmp.lt.s32.totalorder %s34, %s299
        %s301 = scalar_select %p300, %s34, %s299
        %s302 = sadd.s32 %s295, %s301
        %s303 = smul.u32 16, %s302
        %s304 = sld [smem:[#allocation4 + %s33]]
        %s305 = sld [smem:[#allocation5 + %s33]]
        %s306 = ssub.s32 %s305, 1
        %p307 = scmp.gt.s32.totalorder %s306, 0
        %s308 = scalar_select %p307, %s306, 0
        %p309 = scmp.lt.s32.totalorder %s34, %s308
        %s310 = scalar_select %p309, %s34, %s308
        %s311 = sadd.s32 %s304, %s310
        %p312 = scmp.lt.s32.totalorder %s311, 0
        %s313 = scalar_select %p312, %s311, 0
        %s314 = smul.addr %s313, 8
        %s315 = scalar_lea.vmem %s3, %s314
        %s316 = sld [smem:[#allocation4 + %s33]]
        %s317 = sld [smem:[#allocation5 + %s33]]
        %s318 = ssub.s32 %s317, 1
        %p319 = scmp.gt.s32.totalorder %s318, 0
        %s320 = scalar_select %p319, %s318, 0
        %p321 = scmp.lt.s32.totalorder %s34, %s320
        %s322 = scalar_select %p321, %s34, %s320
        %s323 = sadd.s32 %s316, %s322
        %p324 = scmp.eq.s32.totalorder %s34, 0
        // Predicated region
        $region33: #{tpu_custom_call.1} parent=31 // pred_check
          %p325 = pneg %p324
        $region34: #{tpu_custom_call.1} parent=31 // pred_check_branch
          %327 = sbr.rel (%p325) target = $region36
        $region35: #{tpu_custom_call.1} parent=31 // pred_region
          %vm328 = vcmask 64512
          %329 = vst.msk [vmem:[#allocation2] sm:$0xff] %vm328, 0.0
        $region36: #{tpu_custom_call.1} parent=31 // pred_fallthru
          _
        %s330 = sld [smem:[#allocation5 + %s33]]
        %p331 = scmp.lt.s32.totalorder %s34, %s330
        // Predicated region
        $region37: #{tpu_custom_call.1} parent=31 // pred_check
          %p332 = pneg %p331
        $region38: #{tpu_custom_call.1} parent=31 // pred_check_branch
          %334 = sbr.rel (%p332) target = $region40
        $region39: #{tpu_custom_call.1} parent=31 // pred_region
          %v335 = vld [vmem:[%s294] sm:$0xff]
          %v336 = vld [vmem:[%s294 + $0x8] sm:$0xff]
          %v337 = vld [vmem:[%s294 + $0x10] sm:$0xff]
          %v338 = vld [vmem:[%s294 + $0x18] sm:$0xff]
          %v339 = vld [vmem:[%s294 + $0x20] sm:$0xff]
          %v340 = vld [vmem:[%s294 + $0x28] sm:$0xff]
          %v341 = vld [vmem:[%s294 + $0x30] sm:$0xff]
          %v342 = vld [vmem:[%s294 + $0x38] sm:$0xff]
          %v343 = vld [vmem:[%s294 + $0x40] sm:$0xff]
          %v344 = vld [vmem:[%s294 + $0x48] sm:$0xff]
          %v345 = vld [vmem:[%s294 + $0x50] sm:$0xff]
          %v346 = vld [vmem:[%s294 + $0x58] sm:$0xff]
          %v347 = vld [vmem:[%s294 + $0x60] sm:$0xff]
          %v348 = vld [vmem:[%s294 + $0x68] sm:$0xff]
          %v349 = vld [vmem:[%s294 + $0x70] sm:$0xff]
          %v350 = vld [vmem:[%s294 + $0x78] sm:$0xff]
          %s351 = smul.u32 %s33, 8
          %v352 = vstv %s351
          %v353 = vsub.s32 %v335, %v352
          %v354 = vsub.s32 %v336, %v352
          %v355 = vsub.s32 %v337, %v352
          %v356 = vsub.s32 %v338, %v352
          %v357 = vsub.s32 %v339, %v352
          %v358 = vsub.s32 %v340, %v352
          %v359 = vsub.s32 %v341, %v352
          %v360 = vsub.s32 %v342, %v352
          %v361 = vsub.s32 %v343, %v352
          %v362 = vsub.s32 %v344, %v352
          %v363 = vsub.s32 %v345, %v352
          %v364 = vsub.s32 %v346, %v352
          %v365 = vsub.s32 %v347, %v352
          %v366 = vsub.s32 %v348, %v352
          %v367 = vsub.s32 %v349, %v352
          %v368 = vsub.s32 %v350, %v352
          %v369 = vlaneseq
          %v370 = vand.u32 %v369, 127
          %371 = vset.pattern.permute.xlu0 0
          %372 = vperm.xlu0 %371, %v353
          %v373 = vpop.permute.xlu0 %372
          %374 = vset.pattern.permute.xlu0 0
          %375 = vperm.xlu0 %374, %v354
          %v376 = vpop.permute.xlu0 %375
          %377 = vset.pattern.permute.xlu0 0
          %378 = vperm.xlu0 %377, %v355
          %v379 = vpop.permute.xlu0 %378
          %380 = vset.pattern.permute.xlu0 0
          %381 = vperm.xlu0 %380, %v356
          %v382 = vpop.permute.xlu0 %381
          %383 = vset.pattern.permute.xlu0 0
          %384 = vperm.xlu0 %383, %v357
          %v385 = vpop.permute.xlu0 %384
          %386 = vset.pattern.permute.xlu0 0
          %387 = vperm.xlu0 %386, %v358
          %v388 = vpop.permute.xlu0 %387
          %389 = vset.pattern.permute.xlu0 0
          %390 = vperm.xlu0 %389, %v359
          %v391 = vpop.permute.xlu0 %390
          %392 = vset.pattern.permute.xlu0 0
          %393 = vperm.xlu0 %392, %v360
          %v394 = vpop.permute.xlu0 %393
          %395 = vset.pattern.permute.xlu0 0
          %396 = vperm.xlu0 %395, %v361
          %v397 = vpop.permute.xlu0 %396
          %398 = vset.pattern.permute.xlu0 0
          %399 = vperm.xlu0 %398, %v362
          %v400 = vpop.permute.xlu0 %399
          %401 = vset.pattern.permute.xlu0 0
          %402 = vperm.xlu0 %401, %v363
          %v403 = vpop.permute.xlu0 %402
          %404 = vset.pattern.permute.xlu0 0
          %405 = vperm.xlu0 %404, %v364
          %v406 = vpop.permute.xlu0 %405
          %407 = vset.pattern.permute.xlu0 0
          %408 = vperm.xlu0 %407, %v365
          %v409 = vpop.permute.xlu0 %408
          %410 = vset.pattern.permute.xlu0 0
          %411 = vperm.xlu0 %410, %v366
          %v412 = vpop.permute.xlu0 %411
          %413 = vset.pattern.permute.xlu0 0
          %414 = vperm.xlu0 %413, %v367
          %v415 = vpop.permute.xlu0 %414
          %416 = vset.pattern.permute.xlu0 0
          %417 = vperm.xlu0 %416, %v368
          %v418 = vpop.permute.xlu0 %417
          %vm419 = vcmp.eq.s32.totalorder %v373, %v370
          %vm420 = vcmp.eq.s32.totalorder %v376, %v370
          %vm421 = vcmp.eq.s32.totalorder %v379, %v370
          %vm422 = vcmp.eq.s32.totalorder %v382, %v370
          %vm423 = vcmp.eq.s32.totalorder %v385, %v370
          %vm424 = vcmp.eq.s32.totalorder %v388, %v370
          %vm425 = vcmp.eq.s32.totalorder %v391, %v370
          %vm426 = vcmp.eq.s32.totalorder %v394, %v370
          %vm427 = vcmp.eq.s32.totalorder %v397, %v370
          %vm428 = vcmp.eq.s32.totalorder %v400, %v370
          %vm429 = vcmp.eq.s32.totalorder %v403, %v370
          %vm430 = vcmp.eq.s32.totalorder %v406, %v370
          %vm431 = vcmp.eq.s32.totalorder %v409, %v370
          %vm432 = vcmp.eq.s32.totalorder %v412, %v370
          %vm433 = vcmp.eq.s32.totalorder %v415, %v370
          %vm434 = vcmp.eq.s32.totalorder %v418, %v370
          %v435 = vsel %vm419, 1, 0
          %v436 = vsel %vm420, 1, 0
          %v437 = vsel %vm421, 1, 0
          %v438 = vsel %vm422, 1, 0
          %v439 = vsel %vm423, 1, 0
          %v440 = vsel %vm424, 1, 0
          %v441 = vsel %vm425, 1, 0
          %v442 = vsel %vm426, 1, 0
          %v443 = vsel %vm427, 1, 0
          %v444 = vsel %vm428, 1, 0
          %v445 = vsel %vm429, 1, 0
          %v446 = vsel %vm430, 1, 0
          %v447 = vsel %vm431, 1, 0
          %v448 = vsel %vm432, 1, 0
          %v449 = vsel %vm433, 1, 0
          %v450 = vsel %vm434, 1, 0
          %v451 = vcvt.s32.f32 %v435
          %v452 = vcvt.s32.f32 %v436
          %v453 = vcvt.s32.f32 %v437
          %v454 = vcvt.s32.f32 %v438
          %v455 = vcvt.s32.f32 %v439
          %v456 = vcvt.s32.f32 %v440
          %v457 = vcvt.s32.f32 %v441
          %v458 = vcvt.s32.f32 %v442
          %v459 = vcvt.s32.f32 %v443
          %v460 = vcvt.s32.f32 %v444
          %v461 = vcvt.s32.f32 %v445
          %v462 = vcvt.s32.f32 %v446
          %v463 = vcvt.s32.f32 %v447
          %v464 = vcvt.s32.f32 %v448
          %v465 = vcvt.s32.f32 %v449
          %v466 = vcvt.s32.f32 %v450
          %v467 = vld [vmem:[#allocation2] sm:$0xff]
          %v468 = vld [vmem:[%s315] sm:$0xff]
          %469 = vmatprep.subr.mxu0 0.0
          %470 = vmatpush1.msra.mxu0 %v451
          %471 = vmatprep.subr.mxu0 0.0
          %472 = vmatpush1.msra.mxu0 %v452
          %473 = vmatprep.subr.mxu0 0.0
          %474 = vmatpush1.msra.mxu0 %v453
          %475 = vmatprep.subr.mxu0 0.0
          %476 = vmatpush1.msra.mxu0 %v454
          %477 = vmatprep.subr.mxu0 0.0
          %478 = vmatpush1.msra.mxu0 %v455
          %479 = vmatprep.subr.mxu0 0.0
          %480 = vmatpush1.msra.mxu0 %v456
          %481 = vmatprep.subr.mxu0 0.0
          %482 = vmatpush1.msra.mxu0 %v457
          %483 = vmatprep.subr.mxu0 0.0
          %484 = vmatpush1.msra.mxu0 %v458
          %485 = vmatprep.subr.mxu0 0.0
          %486 = vmatpush1.msra.mxu0 %v459
          %487 = vmatprep.subr.mxu0 0.0
          %488 = vmatpush1.msra.mxu0 %v460
          %489 = vmatprep.subr.mxu0 0.0
          %490 = vmatpush1.msra.mxu0 %v461
          %491 = vmatprep.subr.mxu0 0.0
          %492 = vmatpush1.msra.mxu0 %v462
          %493 = vmatprep.subr.mxu0 0.0
          %494 = vmatpush1.msra.mxu0 %v463
          %495 = vmatprep.subr.mxu0 0.0
          %496 = vmatpush1.msra.mxu0 %v464
          %497 = vmatprep.subr.mxu0 0.0
          %498 = vmatpush1.msra.mxu0 %v465
          %499 = vmatprep.subr.mxu0 0.0
          %500 = vmatpush1.msra.mxu0 %v466
          %501 = vmatprep.subr.mxu0 0.0
          %502 = vmatpush1.msra.mxu0 0.0
          %503 = vmatprep.subr.mxu0 0.0
          %504 = vmatpush1.msra.mxu0 0.0
          %505 = vmatprep.subr.mxu0 0.0
          %506 = vmatpush1.msra.mxu0 0.0
          %507 = vmatprep.subr.mxu0 0.0
          %508 = vmatpush1.msra.mxu0 0.0
          %509 = vmatprep.subr.mxu0 0.0
          %510 = vmatpush1.msra.mxu0 0.0
          %511 = vmatprep.subr.mxu0 0.0
          %512 = vmatpush1.msra.mxu0 0.0
          %513 = vmatprep.subr.mxu0 0.0
          %514 = vmatpush1.msra.mxu0 0.0
          %515 = vmatprep.subr.mxu0 0.0
          %516 = vmatpush1.msra.mxu0 0.0
          %517 = vmatprep.subr.mxu0 0.0
          %518 = vmatpush1.msra.mxu0 0.0
          %519 = vmatprep.subr.mxu0 0.0
          %520 = vmatpush1.msra.mxu0 0.0
          %521 = vmatprep.subr.mxu0 0.0
          %522 = vmatpush1.msra.mxu0 0.0
          %523 = vmatprep.subr.mxu0 0.0
          %524 = vmatpush1.msra.mxu0 0.0
          %525 = vmatprep.subr.mxu0 0.0
          %526 = vmatpush1.msra.mxu0 0.0
          %527 = vmatprep.subr.mxu0 0.0
          %528 = vmatpush1.msra.mxu0 0.0
          %529 = vmatprep.subr.mxu0 0.0
          %530 = vmatpush1.msra.mxu0 0.0
          %531 = vmatprep.subr.mxu0 0.0
          %532 = vmatpush1.msra.mxu0 0.0
          %533 = vmatprep.mubr.f32.mxu0 0.0
          %534 = vmatmul.mubr.f32.gmra.mrb[0].mxu0 %v468
          %v535 = vpop.f32.mrb[0].mxu0
          %v536 = vadd.f32 0.0, %v535
          %v537 = vpop.f32.mrb[0].mxu0
          %538 = vdwg.mxu0
          %v539 = vadd.f32 %v467, %v536
          %vm540 = vcmask 64512
          %541 = vst.msk [vmem:[#allocation2] sm:$0xff] %vm540, %v539
        $region40: #{tpu_custom_call.1} parent=31 // pred_fallthru
          _
        // Predicated region
        $region41: #{tpu_custom_call.1} parent=31 // pred_check
          %p542 = pneg %p324
        $region42: #{tpu_custom_call.1} parent=31 // pred_check_branch
          %544 = sbr.rel (%p542) target = $region44
        $region43: #{tpu_custom_call.1} parent=31 // pred_region
          %v545 = vld [vmem:[#allocation2] sm:$0xff]
          %v546 = vld [vmem:[%s4] sm:$0xff]
          %547 = vxpose.xlu0.b32.start [1/16] %v545, 128
          %548 = vxpose.xlu0.b32.cont [2/16] 0.0, 128
          %549 = vxpose.xlu0.b32.cont [3/16] 0.0, 128
          %550 = vxpose.xlu0.b32.cont [4/16] 0.0, 128
          %551 = vxpose.xlu0.b32.cont [5/16] 0.0, 128
          %552 = vxpose.xlu0.b32.cont [6/16] 0.0, 128
          %553 = vxpose.xlu0.b32.cont [7/16] 0.0, 128
          %554 = vxpose.xlu0.b32.cont [8/16] 0.0, 128
          %555 = vxpose.xlu0.b32.cont [9/16] 0.0, 128
          %556 = vxpose.xlu0.b32.cont [10/16] 0.0, 128
          %557 = vxpose.xlu0.b32.cont [11/16] 0.0, 128
          %558 = vxpose.xlu0.b32.cont [12/16] 0.0, 128
          %559 = vxpose.xlu0.b32.cont [13/16] 0.0, 128
          %560 = vxpose.xlu0.b32.cont [14/16] 0.0, 128
          %561 = vxpose.xlu0.b32.cont [15/16] 0.0, 128
          %562 = vxpose.xlu0.b32.end [16/16] 0.0, 128
          %v563 = vpop.trf.xlu0
          %v564 = vpop.trf.xlu0
          %v565 = vpop.trf.xlu0
          %v566 = vpop.trf.xlu0
          %v567 = vpop.trf.xlu0
          %v568 = vpop.trf.xlu0
          %v569 = vpop.trf.xlu0
          %v570 = vpop.trf.xlu0
          %v571 = vpop.trf.xlu0
          %v572 = vpop.trf.xlu0
          %v573 = vpop.trf.xlu0
          %v574 = vpop.trf.xlu0
          %v575 = vpop.trf.xlu0
          %v576 = vpop.trf.xlu0
          %v577 = vpop.trf.xlu0
          %v578 = vpop.trf.xlu0
          %vm579 = vcmask 64512
          %v581 = vsel %vm579, %v563, 0
          %583 = vmatprep.subr.mxu0 0.0
          %v584 = vand.u32 %v546, 4294901760
          %585 = vmatpush1.msra.mxu0 %v584
          %586 = vmatprep.subr.mxu0 0.0
          %587 = vmatpush1.msra.mxu0 0.0
          %588 = vmatprep.subr.mxu0 0.0
          %589 = vmatpush1.msra.mxu0 0.0
          %590 = vmatprep.subr.mxu0 0.0
          %591 = vmatpush1.msra.mxu0 0.0
          %592 = vmatprep.subr.mxu0 0.0
          %593 = vmatpush1.msra.mxu0 0.0
          %594 = vmatprep.subr.mxu0 0.0
          %595 = vmatpush1.msra.mxu0 0.0
          %596 = vmatprep.subr.mxu0 0.0
          %597 = vmatpush1.msra.mxu0 0.0
          %598 = vmatprep.subr.mxu0 0.0
          %599 = vmatpush1.msra.mxu0 0.0
          %600 = vmatprep.subr.mxu0 0.0
          %601 = vmatpush1.msra.mxu0 0.0
          %602 = vmatprep.subr.mxu0 0.0
          %603 = vmatpush1.msra.mxu0 0.0
          %604 = vmatprep.subr.mxu0 0.0
          %605 = vmatpush1.msra.mxu0 0.0
          %606 = vmatprep.subr.mxu0 0.0
          %607 = vmatpush1.msra.mxu0 0.0
          %608 = vmatprep.subr.mxu0 0.0
          %609 = vmatpush1.msra.mxu0 0.0
          %610 = vmatprep.subr.mxu0 0.0
          %611 = vmatpush1.msra.mxu0 0.0
          %612 = vmatprep.subr.mxu0 0.0
          %613 = vmatpush1.msra.mxu0 0.0
          %614 = vmatprep.subr.mxu0 0.0
          %615 = vmatpush1.msra.mxu0 0.0
          %616 = vmatprep.subr.mxu0 0.0
          %617 = vmatpush1.msra.mxu0 0.0
          %618 = vmatprep.subr.mxu0 0.0
          %619 = vmatpush1.msra.mxu0 0.0
          %620 = vmatprep.subr.mxu0 0.0
          %621 = vmatpush1.msra.mxu0 0.0
          %622 = vmatprep.subr.mxu0 0.0
          %623 = vmatpush1.msra.mxu0 0.0
          %624 = vmatprep.subr.mxu0 0.0
          %625 = vmatpush1.msra.mxu0 0.0
          %626 = vmatprep.subr.mxu0 0.0
          %627 = vmatpush1.msra.mxu0 0.0
          %628 = vmatprep.subr.mxu0 0.0
          %629 = vmatpush1.msra.mxu0 0.0
          %630 = vmatprep.subr.mxu0 0.0
          %631 = vmatpush1.msra.mxu0 0.0
          %632 = vmatprep.subr.mxu0 0.0
          %633 = vmatpush1.msra.mxu0 0.0
          %634 = vmatprep.subr.mxu0 0.0
          %635 = vmatpush1.msra.mxu0 0.0
          %636 = vmatprep.subr.mxu0 0.0
          %637 = vmatpush1.msra.mxu0 0.0
          %638 = vmatprep.subr.mxu0 0.0
          %639 = vmatpush1.msra.mxu0 0.0
          %640 = vmatprep.subr.mxu0 0.0
          %641 = vmatpush1.msra.mxu0 0.0
          %642 = vmatprep.subr.mxu0 0.0
          %643 = vmatpush1.msra.mxu0 0.0
          %644 = vmatprep.subr.mxu0 0.0
          %645 = vmatpush1.msra.mxu0 0.0
          %646 = vmatprep.subr.mxu0 0.0
          %647 = vmatpush1.msra.mxu0 0.0
          %648 = vmatprep.mubr.f32.mxu0 0.0
          %v649 = vand.u32 %v581, 4294901760
          %v650 = vsub.f32 %v581, %v649
          %v651 = vand.u32 %v650, 4294901760
          %v652 = vsub.f32 %v650, %v651
          %v653 = vand.u32 %v652, 4294901760
          %654 = vmatmul.mubr.f32.gmra.mrb[0].mxu0 %v653
          %v655 = vpop.f32.mrb[0].mxu0
          %v656 = vadd.f32 0.0, %v655
          %v657 = vpop.f32.mrb[0].mxu0
          %658 = vdwg.mxu0
          %659 = vmatprep.subr.mxu0 0.0
          %v660 = vand.u32 %v546, 4294901760
          %v661 = vsub.f32 %v546, %v660
          %v662 = vand.u32 %v661, 4294901760
          %v663 = vsub.f32 %v661, %v662
          %v664 = vand.u32 %v663, 4294901760
          %665 = vmatpush1.msra.mxu0 %v664
          %666 = vmatprep.subr.mxu0 0.0
          %667 = vmatpush1.msra.mxu0 0.0
          %668 = vmatprep.subr.mxu0 0.0
          %669 = vmatpush1.msra.mxu0 0.0
          %670 = vmatprep.subr.mxu0 0.0
          %671 = vmatpush1.msra.mxu0 0.0
          %672 = vmatprep.subr.mxu0 0.0
          %673 = vmatpush1.msra.mxu0 0.0
          %674 = vmatprep.subr.mxu0 0.0
          %675 = vmatpush1.msra.mxu0 0.0
          %676 = vmatprep.subr.mxu0 0.0
          %677 = vmatpush1.msra.mxu0 0.0
          %678 = vmatprep.subr.mxu0 0.0
          %679 = vmatpush1.msra.mxu0 0.0
          %680 = vmatprep.subr.mxu0 0.0
          %681 = vmatpush1.msra.mxu0 0.0
          %682 = vmatprep.subr.mxu0 0.0
          %683 = vmatpush1.msra.mxu0 0.0
          %684 = vmatprep.subr.mxu0 0.0
          %685 = vmatpush1.msra.mxu0 0.0
          %686 = vmatprep.subr.mxu0 0.0
          %687 = vmatpush1.msra.mxu0 0.0
          %688 = vmatprep.subr.mxu0 0.0
          %689 = vmatpush1.msra.mxu0 0.0
          %690 = vmatprep.subr.mxu0 0.0
          %691 = vmatpush1.msra.mxu0 0.0
          %692 = vmatprep.subr.mxu0 0.0
          %693 = vmatpush1.msra.mxu0 0.0
          %694 = vmatprep.subr.mxu0 0.0
          %695 = vmatpush1.msra.mxu0 0.0
          %696 = vmatprep.subr.mxu0 0.0
          %697 = vmatpush1.msra.mxu0 0.0
          %698 = vmatprep.subr.mxu0 0.0
          %699 = vmatpush1.msra.mxu0 0.0
          %700 = vmatprep.subr.mxu0 0.0
          %701 = vmatpush1.msra.mxu0 0.0
          %702 = vmatprep.subr.mxu0 0.0
          %703 = vmatpush1.msra.mxu0 0.0
          %704 = vmatprep.subr.mxu0 0.0
          %705 = vmatpush1.msra.mxu0 0.0
          %706 = vmatprep.subr.mxu0 0.0
          %707 = vmatpush1.msra.mxu0 0.0
          %708 = vmatprep.subr.mxu0 0.0
          %709 = vmatpush1.msra.mxu0 0.0
          %710 = vmatprep.subr.mxu0 0.0
          %711 = vmatpush1.msra.mxu0 0.0
          %712 = vmatprep.subr.mxu0 0.0
          %713 = vmatpush1.msra.mxu0 0.0
          %714 = vmatprep.subr.mxu0 0.0
          %715 = vmatpush1.msra.mxu0 0.0
          %716 = vmatprep.subr.mxu0 0.0
          %717 = vmatpush1.msra.mxu0 0.0
          %718 = vmatprep.subr.mxu0 0.0
          %719 = vmatpush1.msra.mxu0 0.0
          %720 = vmatprep.subr.mxu0 0.0
          %721 = vmatpush1.msra.mxu0 0.0
          %722 = vmatprep.subr.mxu0 0.0
          %723 = vmatpush1.msra.mxu0 0.0
          %724 = vmatprep.subr.mxu0 0.0
          %725 = vmatpush1.msra.mxu0 0.0
          %726 = vmatprep.subr.mxu0 0.0
          %727 = vmatpush1.msra.mxu0 0.0
          %728 = vmatprep.mubr.f32.mxu0 0.0
          %v729 = vand.u32 %v581, 4294901760
          %730 = vmatmul.mubr.f32.gmra.mrb[0].mxu0 %v729
          %v731 = vpop.f32.mrb[0].mxu0
          %v732 = vadd.f32 %v656, %v731
          %v733 = vpop.f32.mrb[0].mxu0
          %734 = vdwg.mxu0
          %735 = vmatprep.subr.mxu0 0.0
          %v736 = vand.u32 %v546, 4294901760
          %v737 = vsub.f32 %v546, %v736
          %738 = vmatpush1.msra.mxu0 %v737
          %739 = vmatprep.subr.mxu0 0.0
          %740 = vmatpush1.msra.mxu0 0.0
          %741 = vmatprep.subr.mxu0 0.0
          %742 = vmatpush1.msra.mxu0 0.0
          %743 = vmatprep.subr.mxu0 0.0
          %744 = vmatpush1.msra.mxu0 0.0
          %745 = vmatprep.subr.mxu0 0.0
          %746 = vmatpush1.msra.mxu0 0.0
          %747 = vmatprep.subr.mxu0 0.0
          %748 = vmatpush1.msra.mxu0 0.0
          %749 = vmatprep.subr.mxu0 0.0
          %750 = vmatpush1.msra.mxu0 0.0
          %751 = vmatprep.subr.mxu0 0.0
          %752 = vmatpush1.msra.mxu0 0.0
          %753 = vmatprep.subr.mxu0 0.0
          %754 = vmatpush1.msra.mxu0 0.0
          %755 = vmatprep.subr.mxu0 0.0
          %756 = vmatpush1.msra.mxu0 0.0
          %757 = vmatprep.subr.mxu0 0.0
          %758 = vmatpush1.msra.mxu0 0.0
          %759 = vmatprep.subr.mxu0 0.0
          %760 = vmatpush1.msra.mxu0 0.0
          %761 = vmatprep.subr.mxu0 0.0
          %762 = vmatpush1.msra.mxu0 0.0
          %763 = vmatprep.subr.mxu0 0.0
          %764 = vmatpush1.msra.mxu0 0.0
          %765 = vmatprep.subr.mxu0 0.0
          %766 = vmatpush1.msra.mxu0 0.0
          %767 = vmatprep.subr.mxu0 0.0
          %768 = vmatpush1.msra.mxu0 0.0
          %769 = vmatprep.subr.mxu0 0.0
          %770 = vmatpush1.msra.mxu0 0.0
          %771 = vmatprep.subr.mxu0 0.0
          %772 = vmatpush1.msra.mxu0 0.0
          %773 = vmatprep.subr.mxu0 0.0
          %774 = vmatpush1.msra.mxu0 0.0
          %775 = vmatprep.subr.mxu0 0.0
          %776 = vmatpush1.msra.mxu0 0.0
          %777 = vmatprep.subr.mxu0 0.0
          %778 = vmatpush1.msra.mxu0 0.0
          %779 = vmatprep.subr.mxu0 0.0
          %780 = vmatpush1.msra.mxu0 0.0
          %781 = vmatprep.subr.mxu0 0.0
          %782 = vmatpush1.msra.mxu0 0.0
          %783 = vmatprep.subr.mxu0 0.0
          %784 = vmatpush1.msra.mxu0 0.0
          %785 = vmatprep.subr.mxu0 0.0
          %786 = vmatpush1.msra.mxu0 0.0
          %787 = vmatprep.subr.mxu0 0.0
          %788 = vmatpush1.msra.mxu0 0.0
          %789 = vmatprep.subr.mxu0 0.0
          %790 = vmatpush1.msra.mxu0 0.0
          %791 = vmatprep.subr.mxu0 0.0
          %792 = vmatpush1.msra.mxu0 0.0
          %793 = vmatprep.subr.mxu0 0.0
          %794 = vmatpush1.msra.mxu0 0.0
          %795 = vmatprep.subr.mxu0 0.0
          %796 = vmatpush1.msra.mxu0 0.0
          %797 = vmatprep.subr.mxu0 0.0
          %798 = vmatpush1.msra.mxu0 0.0
          %799 = vmatprep.subr.mxu0 0.0
          %800 = vmatpush1.msra.mxu0 0.0
          %801 = vmatprep.mubr.f32.mxu0 0.0
          %v802 = vand.u32 %v581, 4294901760
          %v803 = vsub.f32 %v581, %v802
          %804 = vmatmul.mubr.f32.gmra.mrb[0].mxu0 %v803
          %v805 = vpop.f32.mrb[0].mxu0
          %v806 = vadd.f32 %v732, %v805
          %v807 = vpop.f32.mrb[0].mxu0
          %808 = vdwg.mxu0
          %809 = vmatprep.subr.mxu0 0.0
          %v810 = vand.u32 %v546, 4294901760
          %811 = vmatpush1.msra.mxu0 %v810
          %812 = vmatprep.subr.mxu0 0.0
          %813 = vmatpush1.msra.mxu0 0.0
          %814 = vmatprep.subr.mxu0 0.0
          %815 = vmatpush1.msra.mxu0 0.0
          %816 = vmatprep.subr.mxu0 0.0
          %817 = vmatpush1.msra.mxu0 0.0
          %818 = vmatprep.subr.mxu0 0.0
          %819 = vmatpush1.msra.mxu0 0.0
          %820 = vmatprep.subr.mxu0 0.0
          %821 = vmatpush1.msra.mxu0 0.0
          %822 = vmatprep.subr.mxu0 0.0
          %823 = vmatpush1.msra.mxu0 0.0
          %824 = vmatprep.subr.mxu0 0.0
          %825 = vmatpush1.msra.mxu0 0.0
          %826 = vmatprep.subr.mxu0 0.0
          %827 = vmatpush1.msra.mxu0 0.0
          %828 = vmatprep.subr.mxu0 0.0
          %829 = vmatpush1.msra.mxu0 0.0
          %830 = vmatprep.subr.mxu0 0.0
          %831 = vmatpush1.msra.mxu0 0.0
          %832 = vmatprep.subr.mxu0 0.0
          %833 = vmatpush1.msra.mxu0 0.0
          %834 = vmatprep.subr.mxu0 0.0
          %835 = vmatpush1.msra.mxu0 0.0
          %836 = vmatprep.subr.mxu0 0.0
          %837 = vmatpush1.msra.mxu0 0.0
          %838 = vmatprep.subr.mxu0 0.0
          %839 = vmatpush1.msra.mxu0 0.0
          %840 = vmatprep.subr.mxu0 0.0
          %841 = vmatpush1.msra.mxu0 0.0
          %842 = vmatprep.subr.mxu0 0.0
          %843 = vmatpush1.msra.mxu0 0.0
          %844 = vmatprep.subr.mxu0 0.0
          %845 = vmatpush1.msra.mxu0 0.0
          %846 = vmatprep.subr.mxu0 0.0
          %847 = vmatpush1.msra.mxu0 0.0
          %848 = vmatprep.subr.mxu0 0.0
          %849 = vmatpush1.msra.mxu0 0.0
          %850 = vmatprep.subr.mxu0 0.0
          %851 = vmatpush1.msra.mxu0 0.0
          %852 = vmatprep.subr.mxu0 0.0
          %853 = vmatpush1.msra.mxu0 0.0
          %854 = vmatprep.subr.mxu0 0.0
          %855 = vmatpush1.msra.mxu0 0.0
          %856 = vmatprep.subr.mxu0 0.0
          %857 = vmatpush1.msra.mxu0 0.0
          %858 = vmatprep.subr.mxu0 0.0
          %859 = vmatpush1.msra.mxu0 0.0
          %860 = vmatprep.subr.mxu0 0.0
          %861 = vmatpush1.msra.mxu0 0.0
          %862 = vmatprep.subr.mxu0 0.0
          %863 = vmatpush1.msra.mxu0 0.0
          %864 = vmatprep.subr.mxu0 0.0
          %865 = vmatpush1.msra.mxu0 0.0
          %866 = vmatprep.subr.mxu0 0.0
          %867 = vmatpush1.msra.mxu0 0.0
          %868 = vmatprep.subr.mxu0 0.0
          %869 = vmatpush1.msra.mxu0 0.0
          %870 = vmatprep.subr.mxu0 0.0
          %871 = vmatpush1.msra.mxu0 0.0
          %872 = vmatprep.subr.mxu0 0.0
          %873 = vmatpush1.msra.mxu0 0.0
          %874 = vmatprep.mubr.f32.mxu0 0.0
          %v875 = vand.u32 %v581, 4294901760
          %v876 = vsub.f32 %v581, %v875
          %v877 = vand.u32 %v876, 4294901760
          %878 = vmatmul.mubr.f32.gmra.mrb[0].mxu0 %v877
          %v879 = vpop.f32.mrb[0].mxu0
          %v880 = vadd.f32 %v806, %v879
          %v881 = vpop.f32.mrb[0].mxu0
          %882 = vdwg.mxu0
          %883 = vmatprep.subr.mxu0 0.0
          %v884 = vand.u32 %v546, 4294901760
          %v885 = vsub.f32 %v546, %v884
          %v886 = vand.u32 %v885, 4294901760
          %887 = vmatpush1.msra.mxu0 %v886
          %888 = vmatprep.subr.mxu0 0.0
          %889 = vmatpush1.msra.mxu0 0.0
          %890 = vmatprep.subr.mxu0 0.0
          %891 = vmatpush1.msra.mxu0 0.0
          %892 = vmatprep.subr.mxu0 0.0
          %893 = vmatpush1.msra.mxu0 0.0
          %894 = vmatprep.subr.mxu0 0.0
          %895 = vmatpush1.msra.mxu0 0.0
          %896 = vmatprep.subr.mxu0 0.0
          %897 = vmatpush1.msra.mxu0 0.0
          %898 = vmatprep.subr.mxu0 0.0
          %899 = vmatpush1.msra.mxu0 0.0
          %900 = vmatprep.subr.mxu0 0.0
          %901 = vmatpush1.msra.mxu0 0.0
          %902 = vmatprep.subr.mxu0 0.0
          %903 = vmatpush1.msra.mxu0 0.0
          %904 = vmatprep.subr.mxu0 0.0
          %905 = vmatpush1.msra.mxu0 0.0
          %906 = vmatprep.subr.mxu0 0.0
          %907 = vmatpush1.msra.mxu0 0.0
          %908 = vmatprep.subr.mxu0 0.0
          %909 = vmatpush1.msra.mxu0 0.0
          %910 = vmatprep.subr.mxu0 0.0
          %911 = vmatpush1.msra.mxu0 0.0
          %912 = vmatprep.subr.mxu0 0.0
          %913 = vmatpush1.msra.mxu0 0.0
          %914 = vmatprep.subr.mxu0 0.0
          %915 = vmatpush1.msra.mxu0 0.0
          %916 = vmatprep.subr.mxu0 0.0
          %917 = vmatpush1.msra.mxu0 0.0
          %918 = vmatprep.subr.mxu0 0.0
          %919 = vmatpush1.msra.mxu0 0.0
          %920 = vmatprep.subr.mxu0 0.0
          %921 = vmatpush1.msra.mxu0 0.0
          %922 = vmatprep.subr.mxu0 0.0
          %923 = vmatpush1.msra.mxu0 0.0
          %924 = vmatprep.subr.mxu0 0.0
          %925 = vmatpush1.msra.mxu0 0.0
          %926 = vmatprep.subr.mxu0 0.0
          %927 = vmatpush1.msra.mxu0 0.0
          %928 = vmatprep.subr.mxu0 0.0
          %929 = vmatpush1.msra.mxu0 0.0
          %930 = vmatprep.subr.mxu0 0.0
          %931 = vmatpush1.msra.mxu0 0.0
          %932 = vmatprep.subr.mxu0 0.0
          %933 = vmatpush1.msra.mxu0 0.0
          %934 = vmatprep.subr.mxu0 0.0
          %935 = vmatpush1.msra.mxu0 0.0
          %936 = vmatprep.subr.mxu0 0.0
          %937 = vmatpush1.msra.mxu0 0.0
          %938 = vmatprep.subr.mxu0 0.0
          %939 = vmatpush1.msra.mxu0 0.0
          %940 = vmatprep.subr.mxu0 0.0
          %941 = vmatpush1.msra.mxu0 0.0
          %942 = vmatprep.subr.mxu0 0.0
          %943 = vmatpush1.msra.mxu0 0.0
          %944 = vmatprep.subr.mxu0 0.0
          %945 = vmatpush1.msra.mxu0 0.0
          %946 = vmatprep.subr.mxu0 0.0
          %947 = vmatpush1.msra.mxu0 0.0
          %948 = vmatprep.subr.mxu0 0.0
          %949 = vmatpush1.msra.mxu0 0.0
          %950 = vmatprep.mubr.f32.mxu0 0.0
          %v951 = vand.u32 %v581, 4294901760
          %952 = vmatmul.mubr.f32.gmra.mrb[0].mxu0 %v951
          %v953 = vpop.f32.mrb[0].mxu0
          %v954 = vadd.f32 %v880, %v953
          %v955 = vpop.f32.mrb[0].mxu0
          %956 = vdwg.mxu0
          %957 = vmatprep.subr.mxu0 0.0
          %v958 = vand.u32 %v546, 4294901760
          %959 = vmatpush1.msra.mxu0 %v958
          %960 = vmatprep.subr.mxu0 0.0
          %961 = vmatpush1.msra.mxu0 0.0
          %962 = vmatprep.subr.mxu0 0.0
          %963 = vmatpush1.msra.mxu0 0.0
          %964 = vmatprep.subr.mxu0 0.0
          %965 = vmatpush1.msra.mxu0 0.0
          %966 = vmatprep.subr.mxu0 0.0
          %967 = vmatpush1.msra.mxu0 0.0
          %968 = vmatprep.subr.mxu0 0.0
          %969 = vmatpush1.msra.mxu0 0.0
          %970 = vmatprep.subr.mxu0 0.0
          %971 = vmatpush1.msra.mxu0 0.0
          %972 = vmatprep.subr.mxu0 0.0
          %973 = vmatpush1.msra.mxu0 0.0
          %974 = vmatprep.subr.mxu0 0.0
          %975 = vmatpush1.msra.mxu0 0.0
          %976 = vmatprep.subr.mxu0 0.0
          %977 = vmatpush1.msra.mxu0 0.0
          %978 = vmatprep.subr.mxu0 0.0
          %979 = vmatpush1.msra.mxu0 0.0
          %980 = vmatprep.subr.mxu0 0.0
          %981 = vmatpush1.msra.mxu0 0.0
          %982 = vmatprep.subr.mxu0 0.0
          %983 = vmatpush1.msra.mxu0 0.0
          %984 = vmatprep.subr.mxu0 0.0
          %985 = vmatpush1.msra.mxu0 0.0
          %986 = vmatprep.subr.mxu0 0.0
          %987 = vmatpush1.msra.mxu0 0.0
          %988 = vmatprep.subr.mxu0 0.0
          %989 = vmatpush1.msra.mxu0 0.0
          %990 = vmatprep.subr.mxu0 0.0
          %991 = vmatpush1.msra.mxu0 0.0
          %992 = vmatprep.subr.mxu0 0.0
          %993 = vmatpush1.msra.mxu0 0.0
          %994 = vmatprep.subr.mxu0 0.0
          %995 = vmatpush1.msra.mxu0 0.0
          %996 = vmatprep.subr.mxu0 0.0
          %997 = vmatpush1.msra.mxu0 0.0
          %998 = vmatprep.subr.mxu0 0.0
          %999 = vmatpush1.msra.mxu0 0.0
          %1000 = vmatprep.subr.mxu0 0.0
          %1001 = vmatpush1.msra.mxu0 0.0
          %1002 = vmatprep.subr.mxu0 0.0
          %1003 = vmatpush1.msra.mxu0 0.0
          %1004 = vmatprep.subr.mxu0 0.0
          %1005 = vmatpush1.msra.mxu0 0.0
          %1006 = vmatprep.subr.mxu0 0.0
          %1007 = vmatpush1.msra.mxu0 0.0
          %1008 = vmatprep.subr.mxu0 0.0
          %1009 = vmatpush1.msra.mxu0 0.0
          %1010 = vmatprep.subr.mxu0 0.0
          %1011 = vmatpush1.msra.mxu0 0.0
          %1012 = vmatprep.subr.mxu0 0.0
          %1013 = vmatpush1.msra.mxu0 0.0
          %1014 = vmatprep.subr.mxu0 0.0
          %1015 = vmatpush1.msra.mxu0 0.0
          %1016 = vmatprep.subr.mxu0 0.0
          %1017 = vmatpush1.msra.mxu0 0.0
          %1018 = vmatprep.subr.mxu0 0.0
          %1019 = vmatpush1.msra.mxu0 0.0
          %1020 = vmatprep.subr.mxu0 0.0
          %1021 = vmatpush1.msra.mxu0 0.0
          %1022 = vmatprep.mubr.f32.mxu0 0.0
          %v1023 = vand.u32 %v581, 4294901760
          %1024 = vmatmul.mubr.f32.gmra.mrb[0].mxu0 %v1023
          %v1025 = vpop.f32.mrb[0].mxu0
          %v1026 = vadd.f32 %v954, %v1025
          %v1027 = vpop.f32.mrb[0].mxu0
          %1028 = vdwg.mxu0
          %1029 = vst [vmem:[%s281] sm:$0xff] %v1026
        $region44: #{tpu_custom_call.1} parent=31 // pred_fallthru
          _
        %s1030 = sand.u32 %s154, 1
        %s1031 = scalar_lea.sflag [#allocation7], %s1030
        %s1032 = sand.u32 %s154, 1
        %s1033 = smul.addr %s1032, 8
        %s1034 = scalar_lea.vmem [#allocation6], %s1033
        // Predicated region
        $region45: #{tpu_custom_call.1} parent=31 // pred_check
          %p1035 = pneg %p164
        $region46: #{tpu_custom_call.1} parent=31 // pred_check_branch
          %1037 = sbr.rel (%p1035) target = $region48
        $region47: #{tpu_custom_call.1} parent=31 // pred_region
          %s1039 = ssub.s32 128, 128
          %1040 = vsyncadd %s1031, %s1039
          %s1041 = smul.addr %s33, 128
          %s1042 = scalar_lea.hbm %s5, %s1041
          %s1044 = sshll.u32 %s1034, 4
          %s1045 = int_to_ptr.vmem [resolvable:$true] %s1044
          %1047 = dma.vmem_to_hbm [thread:$0]  %s1045, 128, %s1042, %s1031
        $region48: #{tpu_custom_call.1} parent=31 // pred_fallthru
          _
      $region32: #{tpu_custom_call.1} parent=5 // pred_fallthru
        _
      %p1048 = scmp.le.s32.totalorder 2, %s24
      // Predicated region
      $region49: #{tpu_custom_call.1} parent=5 // pred_check
        %p1049 = pneg %p1048
      $region50: #{tpu_custom_call.1} parent=5 // pred_check_branch
        %1051 = sbr.rel (%p1049) target = $region52
      $region51: #{tpu_custom_call.1} parent=5 // pred_region
        %s1052 = ssub.s32 %s24, 2
        // Predicated region
        $region53: #{tpu_custom_call.1} parent=51 // pred_check
          %p1053 = pneg %p170
        $region54: #{tpu_custom_call.1} parent=51 // pred_check_branch
          %1055 = sbr.rel (%p1053) target = $region56
        $region55: #{tpu_custom_call.1} parent=51 // pred_region
          %s1056 = sand.u32 %s155, 1
          %s1057 = scalar_lea.sflag [#allocation7], %s1056
          %s1058 = sand.u32 %s155, 1
          %s1059 = smul.addr %s1058, 8
          %s1060 = scalar_lea.vmem [#allocation6], %s1059
          %1061 = dma.done %s1057, 128
        $region56: #{tpu_custom_call.1} parent=51 // pred_fallthru
          _
      $region52: #{tpu_custom_call.1} parent=5 // pred_fallthru
        _
    $region6: #{tpu_custom_call.1} parent=1 // loop_footer
      %s28 = sadd.s32 1, %s24
    $region7: #{tpu_custom_call.1} parent=1 // loop_footer_branch
      %23 = sbr.rel target = $region3
    $region8: #{tpu_custom_call.1} parent=1 // loop_exit
      _
    %1062 = vsyncpa [#allocation7], 1
    %s1063 = scalar_lea.sflag [#allocation7], 1
    %1064 = vsyncpa %s1063, 1

</llo_original>
